<compile_context>
chip_gen: v5e
topology: v5e:2x2
jax: 0.10.0
libtpu: 0.0.40
codegen_flags: <defaults>
</compile_context>

<pallas_src>
import jax
import jax.numpy as jnp
from jax.experimental import pallas as pl
from jax.experimental.pallas import tpu as pltpu

EPS = 1e-4


def _gate_kernel(p_ref, x_ref, xw_ref, out_ref):
    """Streaming gate: out = xw * (sigmoid(<X, P>_d) * (1-2*EPS) + EPS).

    p_ref  : [tb, d_c]      precomputed projection P (d_c == d_o)
    x_ref  : [tb, tn, d_o]  object features tile
    xw_ref : [tb, tn]       incoming weights tile (lane-dense 2-D)
    out_ref: [tb, tn]
    """
    # VPU multiply + XLU lane-reduce over d.  An M=1-per-batch MXU matmul would
    # waste 127/128+ MXU rows and pay fill/drain per batch; this kernel is
    # HBM-bound on X, so keep the vector-extended slot free.
    logits = jnp.sum(x_ref[...] * p_ref[...][:, None, :], axis=-1)     # [tb, tn]
    xp = jax.nn.sigmoid(logits) * (1.0 - 2.0 * EPS) + EPS
    out_ref[...] = xw_ref[...] * xp


def _pick_tiles(B, N_o):
    """Sublane-aligned batch tile, lane-aligned N_o tile; full-extent fallback."""
    tb = 8 if (B >= 8 and B % 8 == 0) else B
    tn = N_o
    for cand in (2048, 1024, 512, 256, 128):   # bigger tiles amortize ~0.35us/step
        if N_o % cand == 0:
            tn = cand
            break
    return tb, tn


def f1_forward(x_weights_in, seed, X, W, b, no_answer, *, force_pallas=None):
    """Pallas-backed F1ModuleSimple.forward.

    x_weights_in : [B, N_o]      f32
    seed         : [B, d_w]      f32
    X            : [B, N_o, d_o] f32   (requires d_o == d_c)
    W            : [d_w, d_c]    f32   (transposed vs torch's [d_c, d_w])
    b            : [1, d_c]      f32
    no_answer    : passthrough (any pytree)
    """
    B, N_o, d_o = X.shape
    d_w, d_c = W.shape
    assert seed.shape == (B, d_w), f"seed shape {seed.shape} != ({B},{d_w})"
    assert d_o == d_c, f"X feature dim ({d_o}) must equal concept dim ({d_c})"
    assert x_weights_in.shape == (B, N_o)

    # Hoist the tiny [B,d_w]x[d_w,d_c] projection out of the kernel: plain XLA
    # fuses it and it keeps seed/W/b out of every grid step's DMA set.
    P = (seed @ W + b.reshape(1, d_c)).astype(jnp.float32)             # [B, d_c]

    use_pallas = force_pallas
    if use_pallas is None:
        # At tiny shapes, pallas_call launch + DMA-descriptor overhead dominates;
        # let XLA fuse the whole thing instead.
        use_pallas = X.size >= (1 << 16)

    if not use_pallas:
        logits = jnp.einsum("bnd,bd->bn", X, P)
        xp = jax.nn.sigmoid(logits) * (1.0 - 2.0 * EPS) + EPS
        return x_weights_in * xp, no_answer

    tb, tn = _pick_tiles(B, N_o)
    grid = (B // tb, N_o // tn)

    out = pl.pallas_call(
        _gate_kernel,
        out_shape=jax.ShapeDtypeStruct((B, N_o), x_weights_in.dtype),
        grid_spec=pltpu.PrefetchScalarGridSpec(
            num_scalar_prefetch=0,
            grid=grid,
            in_specs=[
                pl.BlockSpec((tb, d_c), lambda i, j: (i, 0)),         # P
                pl.BlockSpec((tb, tn, d_o), lambda i, j: (i, j, 0)),  # X
                pl.BlockSpec((tb, tn), lambda i, j: (i, j)),          # x_weights_in
            ],
            out_specs=pl.BlockSpec((tb, tn), lambda i, j: (i, j)),    # lane-dense 2-D
        ),
        compiler_params=pltpu.CompilerParams(
            # Both axes independent: v7x's two TensorCores split the work;
            # harmless on single-TC v5e/v6e.
            dimension_semantics=("parallel", "parallel"),
        ),
    )(P, X, x_weights_in)

    return out, no_answer


def f1_reference(x_weights_in, seed, X, W, b):
    P = seed @ W + b                                    # [B, d_c]
    logits = jnp.einsum("bnd,bd->bn", X, P)             # [B, N_o]
    xp = jax.nn.sigmoid(logits) * (1.0 - 2.0 * EPS) + EPS
    return x_weights_in * xp


if __name__ == "__main__":
    # Dims implied by the module: d_w (seed width), d_c (concept dim),
    # d_o (object feature dim) must equal d_c for the matmul to be valid.
    B, N_o = 2, 16
    d_w, d_c, d_o = 32, 32, 32

    key = jax.random.PRNGKey(0)
    k_seed, k_x, k_w, k_wp, k_bp, k_wi = jax.random.split(key, 6)

    seed = jax.random.normal(k_seed, (B, d_w), dtype=jnp.float32)
    X = jax.random.normal(k_x, (B, N_o, d_o), dtype=jnp.float32)
    x_weights_in = jax.random.uniform(k_wi, (B, N_o), dtype=jnp.float32)
    no_answer = jnp.zeros((B, 1), dtype=jnp.float32)    # context['no_answer'] passthrough

    # Deterministic parameter init for nn.Linear(d_w, d_c)
    bound = 1.0 / (d_w ** 0.5)
    W = jax.random.uniform(k_wp, (d_w, d_c), minval=-bound, maxval=bound,
                           dtype=jnp.float32)           # transposed vs torch [d_c, d_w]
    b = jax.random.uniform(k_bp, (1, d_c), minval=-bound, maxval=bound,
                           dtype=jnp.float32)

    # force_pallas=True so the demo exercises the Pallas path even at toy shapes
    # (the default dispatch would route these sizes to pure XLA).
    out, na = f1_forward(x_weights_in, seed, X, W, b, no_answer, force_pallas=True)
    out = jax.block_until_ready(out)

    ref = f1_reference(x_weights_in, seed, X, W, b)
    assert out.shape == (B, N_o)
    assert na.shape == no_answer.shape
    assert jnp.allclose(out, ref, atol=1e-5, rtol=1e-5), "mismatch vs reference"

    print("KERNEL_OK")
</pallas_src>

<mosaic_0001>
module attributes {stable_mosaic.version = 11 : i64} {
  func.func @_gate_kernel(%arg0: i32, %arg1: i32, %arg2: memref<2x32xf32, #tpu.memory_space<vmem>>, %arg3: memref<2x16x32xf32, #tpu.memory_space<vmem>>, %arg4: memref<2x16xf32, #tpu.memory_space<vmem>>, %arg5: memref<2x16xf32, #tpu.memory_space<vmem>>) attributes {dimension_semantics = [#tpu.dimension_semantics<parallel>, #tpu.dimension_semantics<parallel>], iteration_bounds = array<i64: 1, 1>, scalar_prefetch = 0 : i64, scratch_operands = 0 : i64, tpu.core_type = #tpu.core_type<tc>, window_params = [{transform_indices = @transform_0, window_bounds = array<i64: 2, 32>}, {transform_indices = @transform_1, window_bounds = array<i64: 2, 16, 32>}, {transform_indices = @transform_2, window_bounds = array<i64: 2, 16>}, {transform_indices = @transform_3, window_bounds = array<i64: 2, 16>}]} {
    %c0 = arith.constant 0 : index
    %c0_0 = arith.constant 0 : index
    %c0_1 = arith.constant 0 : index
    %0 = vector.load %arg3[%c0, %c0_0, %c0_1] : memref<2x16x32xf32, #tpu.memory_space<vmem>>, vector<2x16x32xf32>
    %c0_2 = arith.constant 0 : index
    %c0_3 = arith.constant 0 : index
    %1 = vector.load %arg2[%c0_2, %c0_3] : memref<2x32xf32, #tpu.memory_space<vmem>>, vector<2x32xf32>
    %2 = vector.shape_cast %1 : vector<2x32xf32> to vector<2x1x32xf32>
    %3 = vector.broadcast %2 : vector<2x1x32xf32> to vector<2x16x32xf32>
    %4 = arith.mulf %0, %3 : vector<2x16x32xf32>
    %cst = arith.constant dense<0.000000e+00> : vector<2x16xf32>
    %5 = vector.multi_reduction <add>, %4, %cst [2] : vector<2x16x32xf32> to vector<2x16xf32>
    %6 = arith.negf %5 : vector<2x16xf32>
    %7 = math.exp %6 : vector<2x16xf32>
    %cst_4 = arith.constant 1.000000e+00 : f32
    %8 = vector.broadcast %cst_4 : f32 to vector<2x16xf32>
    %9 = arith.addf %8, %7 : vector<2x16xf32>
    %10 = arith.divf %8, %9 : vector<2x16xf32>
    %cst_5 = arith.constant 9.998000e-01 : f32
    %11 = vector.broadcast %cst_5 : f32 to vector<2x16xf32>
    %12 = arith.mulf %10, %11 : vector<2x16xf32>
    %cst_6 = arith.constant 9.99999974E-5 : f32
    %13 = vector.broadcast %cst_6 : f32 to vector<2x16xf32>
    %14 = arith.addf %12, %13 : vector<2x16xf32>
    %c0_7 = arith.constant 0 : index
    %c0_8 = arith.constant 0 : index
    %15 = vector.load %arg4[%c0_7, %c0_8] : memref<2x16xf32, #tpu.memory_space<vmem>>, vector<2x16xf32>
    %16 = arith.mulf %15, %14 : vector<2x16xf32>
    %c0_9 = arith.constant 0 : index
    %c0_10 = arith.constant 0 : index
    %17 = vector.load %arg5[%c0_9, %c0_10] : memref<2x16xf32, #tpu.memory_space<vmem>>, vector<2x16xf32>
    tpu.vector_store %arg5[%c0_9, %c0_10], %16 {strides = array<i32>} : memref<2x16xf32, #tpu.memory_space<vmem>>, vector<2x16xf32>,
    return
  }
  func.func @transform_0(%arg0: i32, %arg1: i32) -> (i32, i32) {
    %c0_i32 = arith.constant 0 : i32
    %c0_i32_0 = arith.constant 0 : i32
    return %arg0, %c0_i32 : i32, i32
  }
  func.func @transform_1(%arg0: i32, %arg1: i32) -> (i32, i32, i32) {
    %c0_i32 = arith.constant 0 : i32
    %c0_i32_0 = arith.constant 0 : i32
    return %arg0, %arg1, %c0_i32 : i32, i32, i32
  }
  func.func @transform_2(%arg0: i32, %arg1: i32) -> (i32, i32) {
    %c0_i32 = arith.constant 0 : i32
    return %arg0, %arg1 : i32, i32
  }
  func.func @transform_3(%arg0: i32, %arg1: i32) -> (i32, i32) {
    %c0_i32 = arith.constant 0 : i32
    return %arg0, %arg1 : i32, i32
  }
}

</mosaic_0001>

<llo_original>
// kernel: tpu_custom_call.1
$region0: #{tpu_custom_call.1}
  #allocation0 [shape = 'u32[]', space=smem, size = 0x4, offset = 0x4, fixed_abs, tag = 'smem constant byte address 0x4 - core index']
  #allocation1 [shape = 'u32[72,128]{1,0:T(1,128)}', space=vmem, size = 0x9000, scoped, tag = 'internal scratch']
  %s0 = inlined_call_operand.hbm [shape: f32[2,32], index: 0, kind: input, shape index: {}]
  %s1 = inlined_call_operand.hbm [shape: f32[2,16,32], index: 1, kind: input, shape index: {}]
  %s2 = inlined_call_operand.hbm [shape: f32[2,16], index: 2, kind: input, shape index: {}]
  %s3 = inlined_call_operand.hbm [shape: f32[2,16], index: 3, kind: output, shape index: {}]
  %s4 = sld [smem:[#allocation0]]
  $region34: #{tpu_custom_call.1} parent=0
    _
  %s6 = ssub.s32 1, %s4
  %s7 = scalar_select 0, %s6, %s4
  $region1: #{tpu_custom_call.1} parent=0
    #allocation2 [shape = 'u8[1024]{0}', space=vmem, size = 0x400, scoped, tag = 'input window, operand 0, single buffered']
    #allocation3 [shape = 's32[1]{0}', space=sflag, size = 0x4, scoped, tag = 'scoped memory for tpu_custom_call.1']
    #allocation4 [shape = 's32[1]{0}', space=sflag, size = 0x4, scoped, tag = 'scoped memory for tpu_custom_call.1']
    #allocation5 [shape = 'u8[16384]{0}', space=vmem, size = 0x4000, scoped, tag = 'input window, operand 1, single buffered']
    #allocation6 [shape = 's32[1]{0}', space=sflag, size = 0x4, scoped, tag = 'scoped memory for tpu_custom_call.1']
    #allocation7 [shape = 'u8[1024]{0}', space=vmem, size = 0x400, scoped, tag = 'input window, operand 2, single buffered']
    #allocation8 [shape = 'u8[1024]{0}', space=vmem, size = 0x400, scoped, tag = 'output window, operand 0, single buffered']
    %8 = vsyncpa [#allocation3], 0
    %9 = vsyncpa [#allocation6], 0
    %10 = vsyncpa [#allocation4], 0
    // Predicated region
    $region2: #{tpu_custom_call.1} parent=1 // pred_check
      _
    $region3: #{tpu_custom_call.1} parent=1 // pred_check_branch
      %12 = sbr.rel (0) target = $region5
    $region4: #{tpu_custom_call.1} parent=1 // pred_region
      %14 = vsyncadd [#allocation3], 0
      %s16 = sshll.u32 %s0, 4
      %s17 = int_to_ptr.hbm [resolvable:$true] %s16
      %s18 = sshll.u32 [#allocation2], 4
      %s19 = int_to_ptr.vmem [resolvable:$true] %s18
      %21 = dma.hbm_to_vmem [thread:$0]  %s17, 32, %s19, [#allocation3]
    $region5: #{tpu_custom_call.1} parent=1 // pred_fallthru
      _
    // Predicated region
    $region6: #{tpu_custom_call.1} parent=1 // pred_check
      _
    $region7: #{tpu_custom_call.1} parent=1 // pred_check_branch
      %23 = sbr.rel (0) target = $region9
    $region8: #{tpu_custom_call.1} parent=1 // pred_region
      %25 = vsyncadd [#allocation6], 0
      %s26 = sshll.u32 %s1, 4
      %s27 = int_to_ptr.hbm [resolvable:$true] %s26
      %s28 = sshll.u32 [#allocation5], 4
      %s29 = int_to_ptr.vmem [resolvable:$true] %s28
      %34 = dma.hbm_to_vmem [thread:$0]  %s27, 512, %s29, [#allocation6], 128, 128, 8
    $region9: #{tpu_custom_call.1} parent=1 // pred_fallthru
      _
    // Predicated region
    $region10: #{tpu_custom_call.1} parent=1 // pred_check
      _
    $region11: #{tpu_custom_call.1} parent=1 // pred_check_branch
      %36 = sbr.rel (0) target = $region13
    $region12: #{tpu_custom_call.1} parent=1 // pred_region
      %38 = vsyncadd [#allocation6], 0
      %s40 = sshll.u32 %s2, 4
      %s41 = int_to_ptr.hbm [resolvable:$true] %s40
      %s42 = sshll.u32 [#allocation7], 4
      %s43 = int_to_ptr.vmem [resolvable:$true] %s42
      %45 = dma.hbm_to_vmem [thread:$0]  %s41, 32, %s43, [#allocation6]
    $region13: #{tpu_custom_call.1} parent=1 // pred_fallthru
      _
    // Predicated region
    $region14: #{tpu_custom_call.1} parent=1 // pred_check
      _
    $region15: #{tpu_custom_call.1} parent=1 // pred_check_branch
      %47 = sbr.rel (0) target = $region17
    $region16: #{tpu_custom_call.1} parent=1 // pred_region
      %49 = dma.done [#allocation3], 32
    $region17: #{tpu_custom_call.1} parent=1 // pred_fallthru
      _
    // Predicated region
    $region18: #{tpu_custom_call.1} parent=1 // pred_check
      _
    $region19: #{tpu_custom_call.1} parent=1 // pred_check_branch
      %51 = sbr.rel (0) target = $region21
    $region20: #{tpu_custom_call.1} parent=1 // pred_region
      %53 = dma.done [#allocation6], 512
    $region21: #{tpu_custom_call.1} parent=1 // pred_fallthru
      _
    // Predicated region
    $region22: #{tpu_custom_call.1} parent=1 // pred_check
      _
    $region23: #{tpu_custom_call.1} parent=1 // pred_check_branch
      %55 = sbr.rel (0) target = $region25
    $region24: #{tpu_custom_call.1} parent=1 // pred_region
      %57 = dma.done [#allocation6], 32
    $region25: #{tpu_custom_call.1} parent=1 // pred_fallthru
      _
    %v58 = vld [vmem:[#allocation5] sm:$0xff]
    %v59 = vld [vmem:[#allocation5 + $0x8] sm:$0xff]
    %v60 = vld [vmem:[#allocation5 + $0x10] sm:$0xff]
    %v61 = vld [vmem:[#allocation5 + $0x18] sm:$0xff]
    %v62 = vld [vmem:[#allocation2] sm:$0x3]
    %v64 = vrot.slane %v62, 1
    %v65 = vperm.slane %v62, 0
    %v66 = vperm.slane %v64, 0
    %v69 = vmul.f32 %v58, %v65
    %v70 = vmul.f32 %v59, %v65
    %v71 = vmul.f32 %v60, %v66
    %v72 = vmul.f32 %v61, %v66
    %vm73 = vcmask 261120
    %v74 = vsel %vm73, %v69, 0.0
    %75 = vadd.xlane.f32.xlu0 %v74
    %v76 = vpop.xlane.xlu0 %75
    %v77 = vsel %vm73, %v70, 0.0
    %78 = vadd.xlane.f32.xlu0 %v77
    %v79 = vpop.xlane.xlu0 %78
    %v80 = vsel %vm73, %v71, 0.0
    %81 = vadd.xlane.f32.xlu0 %v80
    %v82 = vpop.xlane.xlu0 %81
    %v83 = vsel %vm73, %v72, 0.0
    %84 = vadd.xlane.f32.xlu0 %v83
    %v85 = vpop.xlane.xlu0 %84
    %v86 = vxor.u32 %v76, 2147483648
    %v87 = vxor.u32 %v79, 2147483648
    %v88 = vxor.u32 %v82, 2147483648
    %v89 = vxor.u32 %v85, 2147483648
    %v90 = vmul.f32 %v86, 1.442695
    %v91 = vpow.pop %v90
    %v92 = vmul.f32 %v87, 1.442695
    %v93 = vpow.pop %v92
    %v94 = vmul.f32 %v88, 1.442695
    %v95 = vpow.pop %v94
    %v96 = vmul.f32 %v89, 1.442695
    %v97 = vpow.pop %v96
    %v98 = vadd.f32 %v91, 1.0
    %v99 = vadd.f32 %v93, 1.0
    %v100 = vadd.f32 %v95, 1.0
    %v101 = vadd.f32 %v97, 1.0
    %v102 = vrcp.pop %v98
    %v103 = vmul.f32 %v98, %v102
    %v104 = vsub.f32 1.0, %v103
    %v105 = vmul.f32 %v102, %v104
    %v106 = vadd.f32 %v102, %v105
    %vm107 = vweird.f32 %v98
    %vm108 = vweird.f32 %v102
    %vm109 = vmor %vm107, %vm108
    %v110 = vsel %vm109, %v102, %v106
    %v111 = vand.u32 2147483647, %v98
    %vm112 = vcmp.eq.f32.partialorder %v111, 8.507059e+37
    %v113 = vand.u32 %v98, 2147483648
    %v114 = vor.u32 1.1754944e-38, %v113
    %v115 = vsel %vm112, %v114, %v110
    %v116 = vmul.f32 1.0, %v115
    %v117 = vrcp.pop %v99
    %v118 = vmul.f32 %v99, %v117
    %v119 = vsub.f32 1.0, %v118
    %v120 = vmul.f32 %v117, %v119
    %v121 = vadd.f32 %v117, %v120
    %vm122 = vweird.f32 %v99
    %vm123 = vweird.f32 %v117
    %vm124 = vmor %vm122, %vm123
    %v125 = vsel %vm124, %v117, %v121
    %v126 = vand.u32 2147483647, %v99
    %vm127 = vcmp.eq.f32.partialorder %v126, 8.507059e+37
    %v128 = vand.u32 %v99, 2147483648
    %v129 = vor.u32 1.1754944e-38, %v128
    %v130 = vsel %vm127, %v129, %v125
    %v131 = vmul.f32 1.0, %v130
    %v132 = vrcp.pop %v100
    %v133 = vmul.f32 %v100, %v132
    %v134 = vsub.f32 1.0, %v133
    %v135 = vmul.f32 %v132, %v134
    %v136 = vadd.f32 %v132, %v135
    %vm137 = vweird.f32 %v100
    %vm138 = vweird.f32 %v132
    %vm139 = vmor %vm137, %vm138
    %v140 = vsel %vm139, %v132, %v136
    %v141 = vand.u32 2147483647, %v100
    %vm142 = vcmp.eq.f32.partialorder %v141, 8.507059e+37
    %v143 = vand.u32 %v100, 2147483648
    %v144 = vor.u32 1.1754944e-38, %v143
    %v145 = vsel %vm142, %v144, %v140
    %v146 = vmul.f32 1.0, %v145
    %v147 = vrcp.pop %v101
    %v148 = vmul.f32 %v101, %v147
    %v149 = vsub.f32 1.0, %v148
    %v150 = vmul.f32 %v147, %v149
    %v151 = vadd.f32 %v147, %v150
    %vm152 = vweird.f32 %v101
    %vm153 = vweird.f32 %v147
    %vm154 = vmor %vm152, %vm153
    %v155 = vsel %vm154, %v147, %v151
    %v156 = vand.u32 2147483647, %v101
    %vm157 = vcmp.eq.f32.partialorder %v156, 8.507059e+37
    %v158 = vand.u32 %v101, 2147483648
    %v159 = vor.u32 1.1754944e-38, %v158
    %v160 = vsel %vm157, %v159, %v155
    %v161 = vmul.f32 1.0, %v160
    %v162 = vmul.f32 %v116, 0.9998
    %v163 = vmul.f32 %v131, 0.9998
    %v164 = vmul.f32 %v146, 0.9998
    %v165 = vmul.f32 %v161, 0.9998
    %v166 = vadd.f32 %v162, 0.0001
    %v167 = vadd.f32 %v163, 0.0001
    %v168 = vadd.f32 %v164, 0.0001
    %v169 = vadd.f32 %v165, 0.0001
    %v170 = vld [vmem:[#allocation7] sm:$0x3]
    %v175 = vlaneseq
    %v176 = vand.u32 %v175, 127
    %v177 = vperm.slane %v166, %v176
    %v178 = vadd.s32 %v176, 4294967288
    %v179 = vperm.slane %v167, %v178
    %vm180 = vcmask 130112
    %v181 = vsel %vm180, %v179, %v177
    %v182 = vperm.slane %v168, %v176
    %v183 = vperm.slane %v169, %v178
    %v184 = vsel %vm180, %v183, %v182
    %vm185 = vcmask 1041409
    %v186 = vsel %vm185, %v184, %v181
    %v188 = vmul.f32 %v170, %v186
    %vm189 = vcmask 123904
    %190 = vst.msk [vmem:[#allocation8] sm:$0x3] %vm189, %v188
    // Predicated region
    $region26: #{tpu_custom_call.1} parent=1 // pred_check
      _
    $region27: #{tpu_custom_call.1} parent=1 // pred_check_branch
      %192 = sbr.rel (0) target = $region29
    $region28: #{tpu_custom_call.1} parent=1 // pred_region
      %194 = vsyncadd [#allocation4], 0
      %s196 = sshll.u32 [#allocation8], 4
      %s197 = int_to_ptr.vmem [resolvable:$true] %s196
      %s198 = sshll.u32 %s3, 4
      %s199 = int_to_ptr.hbm [resolvable:$true] %s198
      %201 = dma.vmem_to_hbm [thread:$0]  %s197, 32, %s199, [#allocation4]
    $region29: #{tpu_custom_call.1} parent=1 // pred_fallthru
      _
    // Predicated region
    $region30: #{tpu_custom_call.1} parent=1 // pred_check
      _
    $region31: #{tpu_custom_call.1} parent=1 // pred_check_branch
      %203 = sbr.rel (0) target = $region33
    $region32: #{tpu_custom_call.1} parent=1 // pred_region
      %205 = dma.done [#allocation4], 32
    $region33: #{tpu_custom_call.1} parent=1 // pred_fallthru
      _
    %206 = vsyncpa [#allocation3], 1
    %207 = vsyncpa [#allocation6], 1
    %208 = vsyncpa [#allocation4], 1

</llo_original>
